<compile_context>
chip_gen: v5e
topology: v5e:2x2
jax: 0.10.0
libtpu: 0.0.40
codegen_flags: <defaults>
</compile_context>

<pallas_src>
import functools

import jax
import jax.numpy as jnp
from jax.experimental import pallas as pl
from jax.experimental.pallas import tpu as pltpu


def _outconv_kernel(x_ref, w_ref, b_ref, o_ref, *, cin, cout):
    """1x1-conv block: o[:, co] = sum_c w[co*cin + c] * x[:, c] + b[co].

    x_ref : VMEM (bn, Cin, tile_r, 128)
    w_ref : SMEM (Cout * Cin,)  float32 scalars
    b_ref : SMEM (Cout,)        float32 scalars
    o_ref : VMEM (bn, Cout, tile_r, 128)
    """
    # Statically unrolled VPU FMA chain over channels.  For the tiny
    # Cout/Cin of this module an MXU matmul would waste >99% of the MXU and
    # force a lane-sparse output for zero bandwidth benefit -- the op is
    # HBM-bound, so the VALU has ample slack even at Cin=64.
    for co in range(cout):
        acc = x_ref[:, 0].astype(jnp.float32) * w_ref[co * cin + 0]
        for c in range(1, cin):
            acc = acc + x_ref[:, c].astype(jnp.float32) * w_ref[co * cin + c]
        o_ref[:, co] = (acc + b_ref[co]).astype(o_ref.dtype)


def _choose_tiling(N, R, cin, cout, itemsize, vmem_budget_bytes, target_steps):
    """Pick (bn, tile_r): batch images per step, spatial row-blocks per step."""
    # dtype-dependent sublane packing: 8 (f32), 16 (bf16/f16), 32 (int8/fp8).
    sub = 8 * max(1, 4 // itemsize)
    # Double-buffered input + output bytes per row of 128 spatial elements.
    bytes_per_row = 2 * (cin + cout) * 128 * itemsize
    max_rows = max(1, vmem_budget_bytes // bytes_per_row)

    if R <= max_rows:
        tile_r = R                                   # whole image per step
        bn = max(1, min(N, max_rows // max(R, 1)))   # fold batch images
    else:
        bn = 1
        tile_r = min(R, max(sub, (max_rows // sub) * sub))

    # Megacore (v7x has 2 TensorCores; grid axes are "parallel"): make sure
    # the enlarged tiles still leave enough grid steps for both cores.
    min_tile = sub if R >= sub else R        # smallest legal row tile
    max_steps = N * pl.cdiv(R, min_tile)
    target = min(target_steps, max_steps)

    def n_steps(bn_, tr_):
        return pl.cdiv(N, bn_) * pl.cdiv(R, tr_)

    while n_steps(bn, tile_r) < target:
        if bn > 1:
            bn = pl.cdiv(bn, 2)
        elif tile_r > min_tile:
            tile_r = max(min_tile, ((tile_r // 2) // sub) * sub)
        else:
            break
    return bn, tile_r


def outconv_forward(x_nchw, weight, bias, *,
                    vmem_budget_bytes=12 * 1024 * 1024, target_steps=4):
    """1x1 conv, stride 1, padding 0 (matches nn.Conv2d(kernel_size=1)).

    x_nchw : (N, Cin, H, W)
    weight : (Cout, Cin, 1, 1)   -- torch Conv2d weight layout
    bias   : (Cout,)
    returns (N, Cout, H, W)
    """
    N, Cin, H, W = x_nchw.shape
    Cout = weight.shape[0]
    HW = H * W
    itemsize = x_nchw.dtype.itemsize

    # Params go to SMEM as 32-bit scalars: cast to f32, flatten to 1D so the
    # SMEM allocation is not padded to an (8,128)-word tile.
    w_flat = weight.reshape(Cout * Cin).astype(jnp.float32)
    b_vec = bias.reshape(Cout).astype(jnp.float32)

    # Fold spatial onto (sublane, lane): (N, Cin, HW) -> (N, Cin, R, 128).
    # Free reshape when HW % 128 == 0; otherwise pad once (rare fallback).
    # TODO(synk): handle the ragged HW tail with an in-kernel masked epilogue
    # instead of materializing a padded copy of x (the pad costs ~2x HBM
    # traffic when taken; zero cost on the common divisible shapes).
    hw_pad = pl.cdiv(HW, 128) * 128
    x3 = x_nchw.reshape(N, Cin, HW)
    if hw_pad != HW:
        x3 = jnp.pad(x3, ((0, 0), (0, 0), (0, hw_pad - HW)))
    R = hw_pad // 128
    x4 = x3.reshape(N, Cin, R, 128)

    bn, tile_r = _choose_tiling(N, R, Cin, Cout, itemsize,
                                vmem_budget_bytes, target_steps)
    grid = (pl.cdiv(N, bn), pl.cdiv(R, tile_r))

    kernel = functools.partial(_outconv_kernel, cin=Cin, cout=Cout)

    out4 = pl.pallas_call(
        kernel,
        out_shape=jax.ShapeDtypeStruct((N, Cout, R, 128), x_nchw.dtype),
        grid=grid,
        in_specs=[
            pl.BlockSpec((bn, Cin, tile_r, 128), lambda n, j: (n, 0, j, 0)),
            pl.BlockSpec(memory_space=pltpu.MemorySpace.SMEM),  # weights
            pl.BlockSpec(memory_space=pltpu.MemorySpace.SMEM),  # bias
        ],
        out_specs=pl.BlockSpec((bn, Cout, tile_r, 128),
                               lambda n, j: (n, 0, j, 0)),
        compiler_params=pltpu.CompilerParams(
            dimension_semantics=("parallel", "parallel"),
        ),
        cost_estimate=pl.CostEstimate(
            flops=2 * N * HW * Cin * Cout,
            transcendentals=0,
            bytes_accessed=N * hw_pad * (Cin + Cout) * itemsize
                           + (Cout * Cin + Cout) * 4,
        ),
    )(x4, w_flat, b_vec)

    out = out4.reshape(N, Cout, hw_pad)
    if hw_pad != HW:
        out = out[:, :, :HW]
    return out.reshape(N, Cout, H, W)


def _reference(x, weight, bias):
    cout, cin = weight.shape[0], weight.shape[1]
    return (jnp.einsum("nchw,oc->nohw", x, weight.reshape(cout, cin))
            + bias.reshape(1, cout, 1, 1))


if __name__ == "__main__":
    key = jax.random.PRNGKey(0)
    kx, kw, kb, kx2, kx3 = jax.random.split(key, 5)

    # Module config: OutConv(in_channels=4, n_classes=1)
    in_channels, n_classes = 4, 1
    N, H, W = 2, 16, 16

    x = jax.random.normal(kx, (N, in_channels, H, W), dtype=jnp.float32)
    weight = jax.random.normal(
        kw, (n_classes, in_channels, 1, 1), dtype=jnp.float32) * 0.1
    bias = jax.random.normal(kb, (n_classes,), dtype=jnp.float32) * 0.1

    out = jax.block_until_ready(outconv_forward(x, weight, bias))
    assert out.shape == (N, n_classes, H, W)
    assert jnp.allclose(out, _reference(x, weight, bias), atol=1e-5, rtol=1e-5)

    # Extra check 1: larger spatial extent -> multi-step tiling / tile-shrink
    # path (>= target_steps parallel grid steps for megacore).
    x_big = jax.random.normal(kx2, (N, in_channels, 64, 64), dtype=jnp.float32)
    out_big = jax.block_until_ready(outconv_forward(x_big, weight, bias))
    assert jnp.allclose(out_big, _reference(x_big, weight, bias),
                        atol=1e-5, rtol=1e-5)

    # Extra check 2: HW not a multiple of 128 -> padded-lane fallback path.
    x_odd = jax.random.normal(kx3, (N, in_channels, 5, 7), dtype=jnp.float32)
    out_odd = jax.block_until_ready(outconv_forward(x_odd, weight, bias))
    assert jnp.allclose(out_odd, _reference(x_odd, weight, bias),
                        atol=1e-5, rtol=1e-5)

    print("KERNEL_OK")
</pallas_src>

<mosaic_0001>
module attributes {stable_mosaic.version = 11 : i64} {
  func.func @_outconv_kernel(%arg0: i32, %arg1: i32, %arg2: memref<1x4x2x128xf32, #tpu.memory_space<vmem>>, %arg3: memref<4xf32, #tpu.memory_space<smem>>, %arg4: memref<1xf32, #tpu.memory_space<smem>>, %arg5: memref<1x1x2x128xf32, #tpu.memory_space<vmem>>) attributes {dimension_semantics = [#tpu.dimension_semantics<parallel>, #tpu.dimension_semantics<parallel>], iteration_bounds = array<i64: 2, 1>, scalar_prefetch = 0 : i64, scratch_operands = 0 : i64, tpu.core_type = #tpu.core_type<tc>, window_params = [{transform_indices = @transform_0, window_bounds = array<i64: 1, 4, 2, 128>}, {transform_indices = @transform_1, window_bounds = array<i64: 4>}, {transform_indices = @transform_2, window_bounds = array<i64: 1>}, {transform_indices = @transform_3, window_bounds = array<i64: 1, 1, 2, 128>}]} {
    %c0 = arith.constant 0 : index
    %c0_0 = arith.constant 0 : index
    %c0_1 = arith.constant 0 : index
    %c0_2 = arith.constant 0 : index
    %0 = vector.load %arg2[%c0, %c0_0, %c0_1, %c0_2] : memref<1x4x2x128xf32, #tpu.memory_space<vmem>>, vector<1x1x2x128xf32>
    %1 = vector.shape_cast %0 : vector<1x1x2x128xf32> to vector<1x2x128xf32>
    %c0_3 = arith.constant 0 : index
    %2 = memref.load %arg3[%c0_3] : memref<4xf32, #tpu.memory_space<smem>>
    %3 = vector.broadcast %2 : f32 to vector<1x2x128xf32>
    %4 = arith.mulf %1, %3 : vector<1x2x128xf32>
    %c0_4 = arith.constant 0 : index
    %c1 = arith.constant 1 : index
    %c0_5 = arith.constant 0 : index
    %c0_6 = arith.constant 0 : index
    %5 = vector.load %arg2[%c0_4, %c1, %c0_5, %c0_6] : memref<1x4x2x128xf32, #tpu.memory_space<vmem>>, vector<1x1x2x128xf32>
    %6 = vector.shape_cast %5 : vector<1x1x2x128xf32> to vector<1x2x128xf32>
    %c1_7 = arith.constant 1 : index
    %7 = memref.load %arg3[%c1_7] : memref<4xf32, #tpu.memory_space<smem>>
    %8 = vector.broadcast %7 : f32 to vector<1x2x128xf32>
    %9 = arith.mulf %6, %8 : vector<1x2x128xf32>
    %10 = arith.addf %4, %9 : vector<1x2x128xf32>
    %c0_8 = arith.constant 0 : index
    %c2 = arith.constant 2 : index
    %c0_9 = arith.constant 0 : index
    %c0_10 = arith.constant 0 : index
    %11 = vector.load %arg2[%c0_8, %c2, %c0_9, %c0_10] : memref<1x4x2x128xf32, #tpu.memory_space<vmem>>, vector<1x1x2x128xf32>
    %12 = vector.shape_cast %11 : vector<1x1x2x128xf32> to vector<1x2x128xf32>
    %c2_11 = arith.constant 2 : index
    %13 = memref.load %arg3[%c2_11] : memref<4xf32, #tpu.memory_space<smem>>
    %14 = vector.broadcast %13 : f32 to vector<1x2x128xf32>
    %15 = arith.mulf %12, %14 : vector<1x2x128xf32>
    %16 = arith.addf %10, %15 : vector<1x2x128xf32>
    %c0_12 = arith.constant 0 : index
    %c3 = arith.constant 3 : index
    %c0_13 = arith.constant 0 : index
    %c0_14 = arith.constant 0 : index
    %17 = vector.load %arg2[%c0_12, %c3, %c0_13, %c0_14] : memref<1x4x2x128xf32, #tpu.memory_space<vmem>>, vector<1x1x2x128xf32>
    %18 = vector.shape_cast %17 : vector<1x1x2x128xf32> to vector<1x2x128xf32>
    %c3_15 = arith.constant 3 : index
    %19 = memref.load %arg3[%c3_15] : memref<4xf32, #tpu.memory_space<smem>>
    %20 = vector.broadcast %19 : f32 to vector<1x2x128xf32>
    %21 = arith.mulf %18, %20 : vector<1x2x128xf32>
    %22 = arith.addf %16, %21 : vector<1x2x128xf32>
    %c0_16 = arith.constant 0 : index
    %23 = memref.load %arg4[%c0_16] : memref<1xf32, #tpu.memory_space<smem>>
    %24 = vector.broadcast %23 : f32 to vector<1x2x128xf32>
    %25 = arith.addf %22, %24 : vector<1x2x128xf32>
    %c0_17 = arith.constant 0 : index
    %c0_18 = arith.constant 0 : index
    %c0_19 = arith.constant 0 : index
    %c0_20 = arith.constant 0 : index
    %26 = vector.load %arg5[%c0_17, %c0_18, %c0_19, %c0_20] : memref<1x1x2x128xf32, #tpu.memory_space<vmem>>, vector<1x1x2x128xf32>
    %27 = vector.shape_cast %26 : vector<1x1x2x128xf32> to vector<1x2x128xf32>
    %28 = vector.shape_cast %25 : vector<1x2x128xf32> to vector<1x1x2x128xf32>
    tpu.vector_store %arg5[%c0_17, %c0_18, %c0_19, %c0_20], %28 {strides = array<i32>} : memref<1x1x2x128xf32, #tpu.memory_space<vmem>>, vector<1x1x2x128xf32>,
    return
  }
  func.func @transform_0(%arg0: i32, %arg1: i32) -> (i32, i32, i32, i32) {
    %c0_i32 = arith.constant 0 : i32
    %c0_i32_0 = arith.constant 0 : i32
    %c0_i32_1 = arith.constant 0 : i32
    return %arg0, %c0_i32, %arg1, %c0_i32_0 : i32, i32, i32, i32
  }
  func.func @transform_1(%arg0: i32, %arg1: i32) -> i32 {
    %c0_i32 = arith.constant 0 : i32
    %c0_i32_0 = arith.constant 0 : i32
    return %c0_i32 : i32
  }
  func.func @transform_2(%arg0: i32, %arg1: i32) -> i32 {
    %c0_i32 = arith.constant 0 : i32
    %c0_i32_0 = arith.constant 0 : i32
    return %c0_i32 : i32
  }
  func.func @transform_3(%arg0: i32, %arg1: i32) -> (i32, i32, i32, i32) {
    %c0_i32 = arith.constant 0 : i32
    %c0_i32_0 = arith.constant 0 : i32
    %c0_i32_1 = arith.constant 0 : i32
    return %arg0, %c0_i32, %arg1, %c0_i32_0 : i32, i32, i32, i32
  }
}

</mosaic_0001>

<llo_original>
// kernel: tpu_custom_call.1
$region0: #{tpu_custom_call.1}
  #allocation0 [shape = 'u32[]', space=smem, size = 0x4, offset = 0x4, fixed_abs, tag = 'smem constant byte address 0x4 - core index']
  #allocation1 [shape = 'u32[72,128]{1,0:T(1,128)}', space=vmem, size = 0x9000, scoped, tag = 'internal scratch']
  #allocation2 [shape = 'f32[1]{0:T(128)S(6)}', space=smem, size = 0x200, scoped, tag = 'scoped memory for tpu_custom_call.1']
  %s0 = inlined_call_operand.hbm [shape: f32[2,4,2,128], index: 0, kind: input, shape index: {}]
  %s1 = inlined_call_operand.vmem [shape: f32[4], index: 1, kind: input, shape index: {}]
  %s2 = inlined_call_operand.<no memory space> [shape: f32[1], index: 2, kind: input, shape index: {}]
  %s3 = inlined_call_operand.hbm [shape: f32[2,1,2,128], index: 3, kind: output, shape index: {}]
  %s4 = sld [smem:[#allocation0]]
  $region53: #{tpu_custom_call.1} parent=0
    _
  %s6 = ssub.s32 1, %s4
  %s7 = scalar_select 0, %s6, %s4
  %8 = sst [smem:[#allocation2]] %s2
  $region1: #{tpu_custom_call.1} parent=0
    #allocation3 [shape = 'u8[8192]{0}', space=vmem, size = 0x2000, scoped, tag = 'input window, operand 0']
    #allocation4 [shape = 's32[2]{0}', space=sflag, size = 0x8, scoped, tag = 'scoped memory for tpu_custom_call.1']
    #allocation5 [shape = 's32[2]{0}', space=sflag, size = 0x8, scoped, tag = 'scoped memory for tpu_custom_call.1']
    #allocation6 [shape = 's32[2]{0}', space=sflag, size = 0x8, scoped, tag = 'scoped memory for tpu_custom_call.1']
    #allocation7 [shape = 'u8[512]{0}', space=smem, size = 0x200, scoped, tag = 'input window, operand 1, single buffered']
    #allocation8 [shape = 'u8[2048]{0}', space=vmem, size = 0x800, scoped, tag = 'output window, operand 0']
    %9 = vsyncpa [#allocation4], 0
    %s10 = scalar_lea.sflag [#allocation4], 1
    %11 = vsyncpa %s10, 0
    %12 = vsyncpa [#allocation6], 0
    %13 = vsyncpa [#allocation5], 0
    %s14 = scalar_lea.sflag [#allocation5], 1
    %15 = vsyncpa %s14, 0
    loop: start=0, step=1, limit=4
    $region2: #{tpu_custom_call.1} parent=1 // loop_pre_header
      _
    $region3: #{tpu_custom_call.1} parent=1 // loop_header
      %s17 = sphi 0, %s21
      %p18 = scmp.ge.s32.totalorder %s17, 4
      %s24 = sphi 0, %s36
      %s25 = sphi 0, %s32
      %s26 = sphi 0, %s24
      %s27 = sphi 0, %s25
      %s28 = sphi 0, %s26
      %s29 = sphi 0, %s27
      %s41 = sphi 0, %s43
      %s44 = sphi 0, %s41
      %s45 = sphi 0, %s44
      %s61 = sphi 0, %s45
      %s65 = sphi 0, %s65
      %s67 = sphi 0, %s65
      %s68 = sphi 0, %s67
      %s82 = sphi 0, %s68
      %s86 = sphi 0, %s86
      %s88 = sphi 0, %s86
      %s89 = sphi 0, %s88
      %s103 = sphi 0, %s89
      %s111 = sphi 0, %s113
      %s114 = sphi 0, %s111
      %s115 = sphi 0, %s114
      %s131 = sphi 0, %s115
    $region4: #{tpu_custom_call.1} parent=1 // loop_header_branch
      %20 = sbr.rel (%p18) target = $region8
    $region5: #{tpu_custom_call.1} parent=1 // loop_body
      %s22 = ssub.s32 %s17, 1
      %s23 = ssub.s32 %s17, 2
      %s30 = sadd.s32 1, %s25
      %p31 = scmp.ge.s32.totalorder %s30, 1
      %s32 = scalar_select %p31, 0, %s30
      %s33 = sadd.s32 1, %s24
      %s34 = scalar_select %p31, %s33, %s24
      %p35 = scmp.ge.s32.totalorder %s34, 2
      %s36 = scalar_select %p35, 0, %s34
      %s37 = ssub.s32 %s24, %s36
      %s38 = ssub.s32 %s25, %s32
      %s39 = sor.u32 %s37, %s38
      %p40 = scmp.eq.s32.totalorder %s39, 0
      %s42 = sadd.s32 %s41, 1
      %s43 = scalar_select %p40, %s41, %s42
      %p46 = pneg %p40
      %p47 = scmp.eq.s32.totalorder %s17, 1
      %p48 = por %p46, %p47
      %p49 = scmp.ne.s32.totalorder %s41, %s44
      %p50 = scmp.eq.s32.totalorder %s17, 0
      %p51 = por %p49, %p50
      %p52 = scmp.ne.s32.totalorder %s41, %s44
      %p53 = scmp.eq.s32.totalorder %s22, 1
      %p54 = por %p52, %p53
      %p55 = scmp.ne.s32.totalorder %s44, %s45
      %p56 = scmp.eq.s32.totalorder %s22, 0
      %p57 = por %p55, %p56
      %p58 = scmp.ne.s32.totalorder %s44, %s45
      %p59 = scmp.eq.s32.totalorder %s23, 1
      %p60 = por %p58, %p59
      %p62 = scmp.ne.s32.totalorder %s45, %s61
      %p63 = scmp.eq.s32.totalorder %s23, 0
      %p64 = por %p62, %p63
      %s66 = sadd.s32 %s65, 1
      %p69 = scmp.eq.s32.totalorder %s17, 1
      %p70 = scmp.ne.s32.totalorder %s65, %s67
      %p71 = scmp.eq.s32.totalorder %s17, 0
      %p72 = por %p70, %p71
      %p73 = scmp.ne.s32.totalorder %s65, %s67
      %p74 = scmp.eq.s32.totalorder %s22, 1
      %p75 = por %p73, %p74
      %p76 = scmp.ne.s32.totalorder %s67, %s68
      %p77 = scmp.eq.s32.totalorder %s22, 0
      %p78 = por %p76, %p77
      %p79 = scmp.ne.s32.totalorder %s67, %s68
      %p80 = scmp.eq.s32.totalorder %s23, 1
      %p81 = por %p79, %p80
      %p83 = scmp.ne.s32.totalorder %s68, %s82
      %p84 = scmp.eq.s32.totalorder %s23, 0
      %p85 = por %p83, %p84
      %s87 = sadd.s32 %s86, 1
      %p90 = scmp.eq.s32.totalorder %s17, 1
      %p91 = scmp.ne.s32.totalorder %s86, %s88
      %p92 = scmp.eq.s32.totalorder %s17, 0
      %p93 = por %p91, %p92
      %p94 = scmp.ne.s32.totalorder %s86, %s88
      %p95 = scmp.eq.s32.totalorder %s22, 1
      %p96 = por %p94, %p95
      %p97 = scmp.ne.s32.totalorder %s88, %s89
      %p98 = scmp.eq.s32.totalorder %s22, 0
      %p99 = por %p97, %p98
      %p100 = scmp.ne.s32.totalorder %s88, %s89
      %p101 = scmp.eq.s32.totalorder %s23, 1
      %p102 = por %p100, %p101
      %p104 = scmp.ne.s32.totalorder %s89, %s103
      %p105 = scmp.eq.s32.totalorder %s23, 0
      %p106 = por %p104, %p105
      %s107 = ssub.s32 %s24, %s36
      %s108 = ssub.s32 %s25, %s32
      %s109 = sor.u32 %s107, %s108
      %p110 = scmp.eq.s32.totalorder %s109, 0
      %s112 = sadd.s32 %s111, 1
      %s113 = scalar_select %p110, %s111, %s112
      %p116 = pneg %p110
      %p117 = scmp.eq.s32.totalorder %s17, 1
      %p118 = por %p116, %p117
      %p119 = scmp.ne.s32.totalorder %s111, %s114
      %p120 = scmp.eq.s32.totalorder %s17, 0
      %p121 = por %p119, %p120
      %p122 = scmp.ne.s32.totalorder %s111, %s114
      %p123 = scmp.eq.s32.totalorder %s22, 1
      %p124 = por %p122, %p123
      %p125 = scmp.ne.s32.totalorder %s114, %s115
      %p126 = scmp.eq.s32.totalorder %s22, 0
      %p127 = por %p125, %p126
      %p128 = scmp.ne.s32.totalorder %s114, %s115
      %p129 = scmp.eq.s32.totalorder %s23, 1
      %p130 = por %p128, %p129
      %p132 = scmp.ne.s32.totalorder %s115, %s131
      %p133 = scmp.eq.s32.totalorder %s23, 0
      %p134 = por %p132, %p133
      %p135 = scmp.le.s32.totalorder 1, %s17
      %p136 = scmp.lt.s32.totalorder %s17, 3
      %p137 = pnand %p135, %p136
      %p138 = pneg %p137
      // Predicated region
      $region9: #{tpu_custom_call.1} parent=5 // pred_check
        _
      $region10: #{tpu_custom_call.1} parent=5 // pred_check_branch
        %140 = sbr.rel (%p137) target = $region12
      $region11: #{tpu_custom_call.1} parent=5 // pred_region
        %s141 = ssub.s32 %s17, 1
        // Predicated region
        $region13: #{tpu_custom_call.1} parent=11 // pred_check
          %p142 = pneg %p78
        $region14: #{tpu_custom_call.1} parent=11 // pred_check_branch
          %144 = sbr.rel (%p142) target = $region16
        $region15: #{tpu_custom_call.1} parent=11 // pred_region
          %146 = vsyncadd [#allocation6], 0
          %s148 = sshll.u32 %s1, 4
          %s149 = int_to_ptr.vmem [resolvable:$true] %s148
          %151 = dma.vmem_to_smem %s149, 16, [#allocation7], [#allocation6]
        $region16: #{tpu_custom_call.1} parent=11 // pred_fallthru
          _
        // Predicated region
        $region17: #{tpu_custom_call.1} parent=11 // pred_check
          %p152 = pneg %p99
        $region18: #{tpu_custom_call.1} parent=11 // pred_check_branch
          %154 = sbr.rel (%p152) target = $region20
        $region19: #{tpu_custom_call.1} parent=11 // pred_region
          _
        $region20: #{tpu_custom_call.1} parent=11 // pred_fallthru
          _
      $region12: #{tpu_custom_call.1} parent=5 // pred_fallthru
        _
      %p155 = scmp.lt.s32.totalorder %s17, 2
      // Predicated region
      $region21: #{tpu_custom_call.1} parent=5 // pred_check
        %p156 = pneg %p155
      $region22: #{tpu_custom_call.1} parent=5 // pred_check_branch
        %158 = sbr.rel (%p156) target = $region24
      $region23: #{tpu_custom_call.1} parent=5 // pred_region
        // Predicated region
        $region25: #{tpu_custom_call.1} parent=23 // pred_check
          %p159 = pneg %p51
        $region26: #{tpu_custom_call.1} parent=23 // pred_check_branch
          %161 = sbr.rel (%p159) target = $region28
        $region27: #{tpu_custom_call.1} parent=23 // pred_region
          %s162 = sand.u32 %s41, 1
          %s163 = scalar_lea.sflag [#allocation4], %s162
          %s164 = sand.u32 %s41, 1
          %s165 = smul.addr %s164, 8
          %s166 = scalar_lea.vmem [#allocation3], %s165
          %168 = vsyncadd %s163, 0
          %s169 = smul.addr %s24, 4
          %s170 = sadd.s32 %s25, %s169
          %s171 = smul.addr %s170, 2
          %s172 = scalar_lea.hbm %s0, %s171
          %s173 = sshll.u32 %s172, 4
          %s174 = int_to_ptr.hbm [resolvable:$true] %s173
          %s175 = sshll.u32 %s166, 4
          %s176 = int_to_ptr.vmem [resolvable:$true] %s175
          %181 = dma.hbm_to_vmem [thread:$0]  %s174, 128, %s176, %s163, 32, 32, 2
        $region28: #{tpu_custom_call.1} parent=23 // pred_fallthru
          _
      $region24: #{tpu_custom_call.1} parent=5 // pred_fallthru
        _
      %p182 = scmp.le.s32.totalorder 1, %s17
      %p183 = scmp.lt.s32.totalorder %s17, 3
      %p184 = pnand %p182, %p183
      %p185 = pneg %p184
      // Predicated region
      $region29: #{tpu_custom_call.1} parent=5 // pred_check
        _
      $region30: #{tpu_custom_call.1} parent=5 // pred_check_branch
        %187 = sbr.rel (%p184) target = $region32
      $region31: #{tpu_custom_call.1} parent=5 // pred_region
        %s188 = ssub.s32 %s17, 1
        %s189 = sand.u32 %s44, 1
        %s190 = scalar_lea.sflag [#allocation4], %s189
        %s191 = sand.u32 %s44, 1
        %s192 = smul.addr %s191, 8
        %s193 = scalar_lea.vmem [#allocation3], %s192
        // Predicated region
        $region33: #{tpu_custom_call.1} parent=31 // pred_check
          %p194 = pneg %p57
        $region34: #{tpu_custom_call.1} parent=31 // pred_check_branch
          %196 = sbr.rel (%p194) target = $region36
        $region35: #{tpu_custom_call.1} parent=31 // pred_region
          %198 = dma.done %s190, 128
        $region36: #{tpu_custom_call.1} parent=31 // pred_fallthru
          _
        // Predicated region
        $region37: #{tpu_custom_call.1} parent=31 // pred_check
          %p199 = pneg %p78
        $region38: #{tpu_custom_call.1} parent=31 // pred_check_branch
          %201 = sbr.rel (%p199) target = $region40
        $region39: #{tpu_custom_call.1} parent=31 // pred_region
          %203 = dma.done [#allocation6], 16
        $region40: #{tpu_custom_call.1} parent=31 // pred_fallthru
          _
        %204 = sfence
        %s205 = sand.u32 %s44, 1
        %s206 = scalar_lea.sflag [#allocation4], %s205
        %s207 = sand.u32 %s44, 1
        %s208 = smul.addr %s207, 8
        %s209 = scalar_lea.vmem [#allocation3], %s208
        %p210 = pneg %p57
        %p211 = pneg %p54
        %p212 = pneg %p78
        %p213 = pneg %p75
        %p214 = pneg %p99
        %p215 = pneg %p96
        %p216 = pneg %p127
        %p217 = pneg %p124
        %s218 = sand.u32 %s114, 1
        %s219 = scalar_lea.sflag [#allocation5], %s218
        %s220 = sand.u32 %s114, 1
        %s221 = smul.addr %s220, 2
        %s222 = scalar_lea.vmem [#allocation8], %s221
        %v223 = vld [vmem:[%s193] sm:$0x3]
        %s224 = sld [smem:[#allocation7]]
        %v225 = vstv %s224
        %v226 = vmul.f32 %v223, %v225
        %s227 = scalar_lea.vmem %s193, 2 [#allocation3]
        %v228 = vld [vmem:[%s227] sm:$0x3]
        %s229 = sld [smem:[#allocation7 + $0x1]]
        %v230 = vstv %s229
        %v231 = vmul.f32 %v228, %v230
        %v232 = vadd.f32 %v226, %v231
        %s233 = scalar_lea.vmem %s193, 4 [#allocation3]
        %v234 = vld [vmem:[%s233] sm:$0x3]
        %s235 = sld [smem:[#allocation7 + $0x2]]
        %v236 = vstv %s235
        %v237 = vmul.f32 %v234, %v236
        %v238 = vadd.f32 %v232, %v237
        %s239 = scalar_lea.vmem %s193, 6 [#allocation3]
        %v240 = vld [vmem:[%s239] sm:$0x3]
        %s241 = sld [smem:[#allocation7 + $0x3]]
        %v242 = vstv %s241
        %v243 = vmul.f32 %v240, %v242
        %v244 = vadd.f32 %v238, %v243
        %s245 = sld [smem:[#allocation2]]
        %v246 = vstv %s245
        %v247 = vadd.f32 %v244, %v246
        %248 = vst [vmem:[%s222] sm:$0x3] %v247
        %s249 = sand.u32 %s114, 1
        %s250 = scalar_lea.sflag [#allocation5], %s249
        %s251 = sand.u32 %s114, 1
        %s252 = smul.addr %s251, 2
        %s253 = scalar_lea.vmem [#allocation8], %s252
        // Predicated region
        $region41: #{tpu_custom_call.1} parent=31 // pred_check
          %p254 = pneg %p124
        $region42: #{tpu_custom_call.1} parent=31 // pred_check_branch
          %256 = sbr.rel (%p254) target = $region44
        $region43: #{tpu_custom_call.1} parent=31 // pred_region
          %258 = vsyncadd %s250, 0
          %s259 = sadd.s32 %s27, %s26
          %s260 = smul.addr %s259, 2
          %s261 = scalar_lea.hbm %s3, %s260
          %s263 = sshll.u32 %s253, 4
          %s264 = int_to_ptr.vmem [resolvable:$true] %s263
          %s265 = sshll.u32 %s261, 4
          %s266 = int_to_ptr.hbm [resolvable:$true] %s265
          %268 = dma.vmem_to_hbm [thread:$0]  %s264, 32, %s266, %s250
        $region44: #{tpu_custom_call.1} parent=31 // pred_fallthru
          _
      $region32: #{tpu_custom_call.1} parent=5 // pred_fallthru
        _
      %p269 = scmp.le.s32.totalorder 2, %s17
      // Predicated region
      $region45: #{tpu_custom_call.1} parent=5 // pred_check
        %p270 = pneg %p269
      $region46: #{tpu_custom_call.1} parent=5 // pred_check_branch
        %272 = sbr.rel (%p270) target = $region48
      $region47: #{tpu_custom_call.1} parent=5 // pred_region
        %s273 = ssub.s32 %s17, 2
        // Predicated region
        $region49: #{tpu_custom_call.1} parent=47 // pred_check
          %p274 = pneg %p130
        $region50: #{tpu_custom_call.1} parent=47 // pred_check_branch
          %276 = sbr.rel (%p274) target = $region52
        $region51: #{tpu_custom_call.1} parent=47 // pred_region
          %s277 = sand.u32 %s115, 1
          %s278 = scalar_lea.sflag [#allocation5], %s277
          %s279 = sand.u32 %s115, 1
          %s280 = smul.addr %s279, 2
          %s281 = scalar_lea.vmem [#allocation8], %s280
          %283 = dma.done %s278, 32
        $region52: #{tpu_custom_call.1} parent=47 // pred_fallthru
          _
      $region48: #{tpu_custom_call.1} parent=5 // pred_fallthru
        _
    $region6: #{tpu_custom_call.1} parent=1 // loop_footer
      %s21 = sadd.s32 1, %s17
    $region7: #{tpu_custom_call.1} parent=1 // loop_footer_branch
      %16 = sbr.rel target = $region3
    $region8: #{tpu_custom_call.1} parent=1 // loop_exit
      _
    %284 = vsyncpa [#allocation4], 1
    %s285 = scalar_lea.sflag [#allocation4], 1
    %286 = vsyncpa %s285, 1
    %287 = vsyncpa [#allocation5], 1
    %s288 = scalar_lea.sflag [#allocation5], 1
    %289 = vsyncpa %s288, 1
    %290 = vsyncpa [#allocation6], 1
    %s291 = scalar_lea.sflag [#allocation6], 1
    %292 = vsyncpa %s291, 1

</llo_original>
